<compile_context>
chip_gen: v7x
topology: tpu7x:2x2x1
jax: 0.10.0
libtpu: 0.0.40
codegen_flags: <defaults>
</compile_context>

<pallas_src>
import numpy as np
import jax
import jax.numpy as jnp
from jax.experimental import pallas as pl
from jax.experimental.pallas import tpu as pltpu


def _physical_vmem_bytes():
    try:
        return int(pltpu.get_tpu_info().vmem_capacity_bytes)
    except Exception:
        return 64 << 20                    # conservative fallback (v7x per-TC)


def _vmem_limit(est_bytes):
    # Generation-aware scoped-VMEM limit: 2x the per-block estimate plus
    # headroom, capped at ~40 MiB on 64 MiB parts (v7x: leave room for output
    # double-buffering + compiler scratch) and ~96 MiB on 128 MiB parts
    # (v5e/v6e: don't starve the pipeline).
    phys = _physical_vmem_bytes()
    hard_cap = (40 << 20) if phys <= (64 << 20) else (96 << 20)
    return int(min(max(2 * est_bytes + (4 << 20), 32 << 20), hard_cap))


# --------------------------------------------------------------------------
# Kernel 1: DurationPredictor
#   conv1d('same') -> LayerNorm -> conv1d('same') -> LayerNorm -> Linear(d,1)
#   Bb batch rows per grid step; per-tap bf16 matmuls from a padded VMEM
#   scratch; f32 accumulation; lane-dense (Bb, 1, L) output.
# --------------------------------------------------------------------------
def _dur_pred_kernel(x_ref, w1_ref, b1_ref, g1_ref, be1_ref,
                     w2_ref, b2_ref, g2_ref, be2_ref,
                     wl_ref, bl_ref, out_ref, pad_ref):
    Bb, L, D = x_ref.shape
    K = w1_ref.shape[0]
    pad = (K - 1) // 2                     # 'same' padding, odd kernel assumed

    # zero the (K-1)-row halo once; only the middle L rows are rewritten below
    pad_ref[...] = jnp.zeros_like(pad_ref)

    def conv_ln(inp2d, w_taps_ref, b, g, be):
        # stage the layer input into the padded scratch once, then accumulate
        # K shifted-slice matmuls (bf16 operands, f32 accumulation on the MXU)
        pad_ref[:, pad:pad + L, :] = inp2d.reshape(Bb, L, D)
        padded = pad_ref[...]                              # (Bb, L+K-1, D) f32
        acc = jnp.zeros((Bb * L, D), jnp.float32)
        for k in range(K):                                 # static tap unroll
            tap = padded[:, k:k + L, :].reshape(Bb * L, D).astype(jnp.bfloat16)
            acc = acc + jnp.dot(tap, w_taps_ref[k],
                                preferred_element_type=jnp.float32)
        h = acc + b                                        # conv bias
        # fused LayerNorm statistics: var = E[h^2] - mu^2 (one pass over h)
        mu = jnp.mean(h, axis=-1, keepdims=True)
        var = jnp.mean(h * h, axis=-1, keepdims=True) - mu * mu
        return (h - mu) * jax.lax.rsqrt(var + 1e-5) * g + be

    h = conv_ln(x_ref[...].reshape(Bb * L, D),
                w1_ref, b1_ref[...], g1_ref[...], be1_ref[...])
    # drop_1: identity in eval mode
    h = conv_ln(h, w2_ref, b2_ref[...], g2_ref[...], be2_ref[...])
    # drop_2: identity in eval mode

    # Linear(D, 1) as a VPU lane reduction -> lane-dense (Bb, 1, L) output
    h3 = h.reshape(Bb, L, D)
    dur = jnp.sum(h3 * wl_ref[...], axis=-1) + bl_ref[...]          # (Bb, L)
    out_ref[...] = dur[:, None, :].astype(out_ref.dtype)


def _pick_batch_block(B, L, D):
    # Enough rows per block (~1024) to fill the MXU M-dim, bounded by a VMEM
    # activation budget; must divide B so there are no partial batch blocks.
    budget = 8 << 20
    cap = max(1, budget // max(16 * L * D, 1))
    want = max(1, min(B, cap, -(-1024 // max(L, 1))))
    for bb in range(want, 0, -1):
        if B % bb == 0:
            return bb
    return 1


def duration_predictor(x, kparams):
    B, L, D = x.shape
    K = kparams['w1m'].shape[0]
    Bb = _pick_batch_block(B, L, D)

    def full(shape):
        return pl.BlockSpec(shape, lambda i: (0,) * len(shape))

    est = (16 * Bb * L * D             # f32 activations + scratch + slack
           + 4 * K * D * D             # two bf16 tap-weight stacks
           + 4 * Bb * L + 64 * D)
    out = pl.pallas_call(
        _dur_pred_kernel,
        out_shape=jax.ShapeDtypeStruct((B, 1, L), jnp.float32),
        grid=(B // Bb,),
        in_specs=[
            pl.BlockSpec((Bb, L, D), lambda i: (i, 0, 0)),
            full((K, D, D)), full((1, D)), full((1, D)), full((1, D)),
            full((K, D, D)), full((1, D)), full((1, D)), full((1, D)),
            full((1, D)), full((1, 1)),
        ],
        out_specs=pl.BlockSpec((Bb, 1, L), lambda i: (i, 0, 0)),
        scratch_shapes=[pltpu.VMEM((Bb, L + K - 1, D), jnp.float32)],
        compiler_params=pltpu.CompilerParams(
            dimension_semantics=("parallel",),   # megacore split on v7x
            vmem_limit_bytes=_vmem_limit(est)),
    )(x, kparams['w1m'], kparams['b1'], kparams['g1'], kparams['be1'],
      kparams['w2m'], kparams['b2'], kparams['g2'], kparams['be2'],
      kparams['wl'], kparams['bl'])
    # TODO(synk): for very long L, also tile over L with a (K-1) halo.
    return out[:, 0, :]                                  # (B, L)


# --------------------------------------------------------------------------
# Kernel 2: Length regulation, gridded (batch, output-time-tile).
#   Only the (tT, L) slice of this batch row's alignment matrix is built
#   (bf16) and alignment @ x runs on the MXU with f32 accumulation.
# --------------------------------------------------------------------------
def _lr_kernel(starts_ref, ends_ref, x_ref, out_ref):
    starts = starts_ref[0]                 # (1, L) int32 exclusive prefix sums
    ends = ends_ref[0]                     # (1, L) int32 inclusive prefix sums
    x = x_ref[0]                           # (L, D) bf16
    L = x.shape[0]
    tT = out_ref.shape[1]

    t0 = pl.program_id(1) * tT
    t_idx = jax.lax.broadcasted_iota(jnp.int32, (tT, L), 0) + t0
    # alignment[t, j] = 1  iff  starts[j] <= t < ends[j]   (one-hot rows)
    cond = jnp.logical_and(t_idx >= starts, t_idx < ends)
    align = jnp.where(cond, 1.0, 0.0).astype(jnp.bfloat16)
    out = jnp.dot(align, x, preferred_element_type=jnp.float32)     # MXU bf16
    out_ref[...] = out[None].astype(out_ref.dtype)


def length_regulate(x, starts, ends, expand_max_len, *, tile_t=512):
    B, L, D = x.shape
    T = int(expand_max_len)
    if T == 0:
        # degenerate case: torch produces an empty (B, 0, D) tensor
        return jnp.zeros((B, 0, D), x.dtype)
    tT = T if T <= tile_t else tile_t      # full-dim block if small, else 512
    x_b = x.astype(jnp.bfloat16)           # bf16 MXU operand (half the DMA too)
    s3 = starts[:, None, :].astype(jnp.int32)              # (B, 1, L)
    e3 = ends[:, None, :].astype(jnp.int32)
    est = 4 * tT * D + 12 * tT * L + 2 * L * D + 8 * L
    # TODO(synk): for very long phoneme sequences (L >> 512) replace the
    # one-hot matmul with a per-frame source-index gather (scalar prefetch +
    # row DMA) to drop O(T*L*D) MXU work to O(T*D) bytes moved.
    return pl.pallas_call(
        _lr_kernel,
        out_shape=jax.ShapeDtypeStruct((B, T, D), x.dtype),
        grid=(B, pl.cdiv(T, tT)),
        in_specs=[pl.BlockSpec((1, 1, L), lambda b, t: (b, 0, 0)),
                  pl.BlockSpec((1, 1, L), lambda b, t: (b, 0, 0)),
                  pl.BlockSpec((1, L, D), lambda b, t: (b, 0, 0))],
        out_specs=pl.BlockSpec((1, tT, D), lambda b, t: (b, t, 0)),
        compiler_params=pltpu.CompilerParams(
            dimension_semantics=("parallel", "parallel"),
            vmem_limit_bytes=_vmem_limit(est)),
    )(s3, e3, x_b)


# --------------------------------------------------------------------------
# Host-side glue (matches Length_Regulator.forward)
# --------------------------------------------------------------------------
@jax.jit
def _duration_bounds(durations):
    d = durations.astype(jnp.int32)
    ends = jnp.cumsum(d, axis=-1)          # inclusive prefix sums (exact int32)
    starts = ends - d                      # exclusive prefix sums
    return starts, ends, jnp.max(ends[:, -1])


def length_regulator_forward(x, kparams, target=None, alpha=1.0):
    B, L, D = x.shape
    dur_preds = duration_predictor(x, kparams)                 # (B, L) float32

    if target is not None:
        durations = target[:, :L].astype(jnp.int32)
    else:
        # (dur_preds * alpha).exp().int() -> truncation toward zero (spec)
        durations = jnp.exp(dur_preds * alpha).astype(jnp.int32)[:, :L]

    starts, ends, max_total = _duration_bounds(durations)
    # data-dependent output length -> single device->host sync (as in PyTorch)
    expand_max_len = int(max_total)
    output = length_regulate(x, starts, ends, expand_max_len)
    return (output, dur_preds) if target is not None else (output, None)


# --------------------------------------------------------------------------
# Parameters (shapes per DurationPredictor.__init__) + hoisted kernel relayout
# --------------------------------------------------------------------------
def init_params(key, d_model, kernel_size):
    D, K = d_model, kernel_size
    ks = jax.random.split(key, 6)

    def u(k, shape, fan_in):
        bound = 1.0 / (fan_in ** 0.5)
        return jax.random.uniform(k, shape, jnp.float32, -bound, bound)

    return dict(
        w1=u(ks[0], (D, D, K), D * K), b1=u(ks[1], (1, D), D * K),
        g1=jnp.ones((1, D), jnp.float32), be1=jnp.zeros((1, D), jnp.float32),
        w2=u(ks[2], (D, D, K), D * K), b2=u(ks[3], (1, D), D * K),
        g2=jnp.ones((1, D), jnp.float32), be2=jnp.zeros((1, D), jnp.float32),
        wl=u(ks[4], (1, D), D),       bl=u(ks[5], (1, 1), D),
    )


def prepare_params(params):
    """One-time relayout of conv weights to bf16 per-tap matmul form
    (hoisted out of the per-forward path)."""
    def to_taps(w):                        # (Dout, Din, K) -> (K, Din, Dout)
        return jnp.transpose(w, (2, 1, 0)).astype(jnp.bfloat16)
    kp = dict(params)
    kp['w1m'] = to_taps(params['w1'])
    kp['w2m'] = to_taps(params['w2'])
    return kp


# --------------------------------------------------------------------------
# Pure-JAX / numpy references for correctness cross-checks
# --------------------------------------------------------------------------
def _dur_pred_ref(x, params):
    def conv(inp, w, b):
        K = w.shape[-1]
        pad = (K - 1) // 2
        L = inp.shape[1]
        xp = jnp.pad(inp, ((0, 0), (pad, pad), (0, 0)))
        acc = sum(jnp.einsum('bld,od->blo', xp[:, k:k + L, :], w[:, :, k])
                  for k in range(K))
        return acc + b

    def ln(h, g, be):
        mu = h.mean(-1, keepdims=True)
        var = ((h - mu) ** 2).mean(-1, keepdims=True)
        return (h - mu) * jax.lax.rsqrt(var + 1e-5) * g + be

    h = ln(conv(x, params['w1'], params['b1']), params['g1'], params['be1'])
    h = ln(conv(h, params['w2'], params['b2']), params['g2'], params['be2'])
    return jnp.einsum('bld,d->bl', h, params['wl'][0]) + params['bl'][0, 0]


if __name__ == "__main__":
    key = jax.random.PRNGKey(0)
    kx, kt, kp_key = jax.random.split(key, 3)

    B, L, D, K = 2, 8, 32, 3          # batch, seq len, d_model, kernel_size
    x = jax.random.normal(kx, (B, L, D), jnp.float32)
    target = jax.random.randint(kt, (B, L), 1, 4, jnp.int32)  # g.t. durations
    params = init_params(kp_key, D, K)
    kparams = prepare_params(params)  # hoisted bf16 weight relayout

    # teacher-forcing path: returns (expanded output, duration predictions)
    out, dur_preds = length_regulator_forward(x, kparams, target=target)
    jax.block_until_ready(out)
    jax.block_until_ready(dur_preds)

    # --- cross-check duration predictor against a pure-JAX f32 reference ---
    ref_dur = _dur_pred_ref(x, params)
    np.testing.assert_allclose(np.asarray(dur_preds), np.asarray(ref_dur),
                               rtol=2e-2, atol=2e-2)   # bf16 MXU operands

    # --- cross-check length regulation against the numpy create_alignment ---
    dur_np = np.asarray(target)
    T = int(dur_np.sum(axis=1).max())
    align = np.zeros((B, T, L), np.float32)
    for i in range(B):
        c = 0
        for j in range(L):
            align[i, c:c + dur_np[i, j], j] = 1.0
            c += int(dur_np[i, j])
    ref_out = np.einsum('btl,bld->btd', align, np.asarray(x))
    np.testing.assert_allclose(np.asarray(out), ref_out, rtol=2e-2, atol=2e-2)
    assert out.shape == (B, T, D)

    # inference path: durations come from the predictor itself
    out_inf, none_ret = length_regulator_forward(x, kparams, target=None,
                                                 alpha=1.0)
    jax.block_until_ready(out_inf)
    assert none_ret is None
    assert out_inf.shape[0] == B and out_inf.shape[2] == D

    print("KERNEL_OK")
</pallas_src>

<mosaic_0001>
module attributes {stable_mosaic.version = 11 : i64} {
  func.func @_dur_pred_kernel(%arg0: i32, %arg1: memref<2x8x32xf32, #tpu.memory_space<vmem>>, %arg2: memref<3x32x32xbf16, #tpu.memory_space<vmem>>, %arg3: memref<1x32xf32, #tpu.memory_space<vmem>>, %arg4: memref<1x32xf32, #tpu.memory_space<vmem>>, %arg5: memref<1x32xf32, #tpu.memory_space<vmem>>, %arg6: memref<3x32x32xbf16, #tpu.memory_space<vmem>>, %arg7: memref<1x32xf32, #tpu.memory_space<vmem>>, %arg8: memref<1x32xf32, #tpu.memory_space<vmem>>, %arg9: memref<1x32xf32, #tpu.memory_space<vmem>>, %arg10: memref<1x32xf32, #tpu.memory_space<vmem>>, %arg11: memref<1x1xf32, #tpu.memory_space<vmem>>, %arg12: memref<2x1x8xf32, #tpu.memory_space<vmem>>, %arg13: memref<2x10x32xf32, #tpu.memory_space<vmem>>) attributes {dimension_semantics = [#tpu.dimension_semantics<parallel>], iteration_bounds = array<i64: 1>, scalar_prefetch = 0 : i64, scratch_operands = 1 : i64, tpu.core_type = #tpu.core_type<tc>, window_params = [{transform_indices = @transform_0, window_bounds = array<i64: 2, 8, 32>}, {pipeline_mode = #tpu.pipeline_mode<synchronous>, transform_indices = @transform_1, window_bounds = array<i64: 3, 32, 32>}, {pipeline_mode = #tpu.pipeline_mode<synchronous>, transform_indices = @transform_2, window_bounds = array<i64: 1, 32>}, {pipeline_mode = #tpu.pipeline_mode<synchronous>, transform_indices = @transform_3, window_bounds = array<i64: 1, 32>}, {pipeline_mode = #tpu.pipeline_mode<synchronous>, transform_indices = @transform_4, window_bounds = array<i64: 1, 32>}, {pipeline_mode = #tpu.pipeline_mode<synchronous>, transform_indices = @transform_5, window_bounds = array<i64: 3, 32, 32>}, {pipeline_mode = #tpu.pipeline_mode<synchronous>, transform_indices = @transform_6, window_bounds = array<i64: 1, 32>}, {pipeline_mode = #tpu.pipeline_mode<synchronous>, transform_indices = @transform_7, window_bounds = array<i64: 1, 32>}, {pipeline_mode = #tpu.pipeline_mode<synchronous>, transform_indices = @transform_8, window_bounds = array<i64: 1, 32>}, {pipeline_mode = #tpu.pipeline_mode<synchronous>, transform_indices = @transform_9, window_bounds = array<i64: 1, 32>}, {pipeline_mode = #tpu.pipeline_mode<synchronous>, transform_indices = @transform_10, window_bounds = array<i64: 1, 1>}, {transform_indices = @transform_11, window_bounds = array<i64: 2, 1, 8>}]} {
    %cst = arith.constant 0.000000e+00 : f32
    %0 = vector.broadcast %cst : f32 to vector<2x10x32xf32>
    %c0 = arith.constant 0 : index
    %c0_0 = arith.constant 0 : index
    %c0_1 = arith.constant 0 : index
    %1 = vector.load %arg13[%c0, %c0_0, %c0_1] : memref<2x10x32xf32, #tpu.memory_space<vmem>>, vector<2x10x32xf32>
    tpu.vector_store %arg13[%c0, %c0_0, %c0_1], %0 {strides = array<i32>} : memref<2x10x32xf32, #tpu.memory_space<vmem>>, vector<2x10x32xf32>,
    %c0_2 = arith.constant 0 : index
    %c0_3 = arith.constant 0 : index
    %c0_4 = arith.constant 0 : index
    %2 = vector.load %arg1[%c0_2, %c0_3, %c0_4] : memref<2x8x32xf32, #tpu.memory_space<vmem>>, vector<2x8x32xf32>
    %3 = vector.shape_cast %2 : vector<2x8x32xf32> to vector<16x32xf32>
    %c0_5 = arith.constant 0 : index
    %c0_6 = arith.constant 0 : index
    %4 = vector.load %arg3[%c0_5, %c0_6] : memref<1x32xf32, #tpu.memory_space<vmem>>, vector<1x32xf32>
    %c0_7 = arith.constant 0 : index
    %c0_8 = arith.constant 0 : index
    %5 = vector.load %arg4[%c0_7, %c0_8] : memref<1x32xf32, #tpu.memory_space<vmem>>, vector<1x32xf32>
    %c0_9 = arith.constant 0 : index
    %c0_10 = arith.constant 0 : index
    %6 = vector.load %arg5[%c0_9, %c0_10] : memref<1x32xf32, #tpu.memory_space<vmem>>, vector<1x32xf32>
    %7 = vector.shape_cast %3 : vector<16x32xf32> to vector<2x8x32xf32>
    %c0_11 = arith.constant 0 : index
    %c1 = arith.constant 1 : index
    %c0_12 = arith.constant 0 : index
    %8 = vector.load %arg13[%c0_11, %c1, %c0_12] : memref<2x10x32xf32, #tpu.memory_space<vmem>>, vector<2x8x32xf32>
    tpu.vector_store %arg13[%c0_11, %c1, %c0_12], %7 {strides = array<i32>} : memref<2x10x32xf32, #tpu.memory_space<vmem>>, vector<2x8x32xf32>,
    %c0_13 = arith.constant 0 : index
    %c0_14 = arith.constant 0 : index
    %c0_15 = arith.constant 0 : index
    %9 = vector.load %arg13[%c0_13, %c0_14, %c0_15] : memref<2x10x32xf32, #tpu.memory_space<vmem>>, vector<2x10x32xf32>
    %cst_16 = arith.constant 0.000000e+00 : f32
    %10 = vector.broadcast %cst_16 : f32 to vector<16x32xf32>
    %11 = vector.extract_strided_slice %9 {offsets = [0, 0, 0], sizes = [2, 8, 32], strides = [1, 1, 1]} : vector<2x10x32xf32> to vector<2x8x32xf32>
    %12 = vector.shape_cast %11 : vector<2x8x32xf32> to vector<16x32xf32>
    %13 = arith.truncf %12 : vector<16x32xf32> to vector<16x32xbf16>
    %c0_17 = arith.constant 0 : index
    %c0_18 = arith.constant 0 : index
    %c0_19 = arith.constant 0 : index
    %14 = vector.load %arg2[%c0_17, %c0_18, %c0_19] : memref<3x32x32xbf16, #tpu.memory_space<vmem>>, vector<1x32x32xbf16>
    %15 = vector.shape_cast %14 : vector<1x32x32xbf16> to vector<32x32xbf16>
    %cst_20 = arith.constant dense<0.000000e+00> : vector<16x32xf32>
    %16 = tpu.matmul %13, %15, %cst_20 {dimension_numbers = #tpu.dot_dimension_numbers<[1], [0], [0], [1], [0, 0, 1, 1], [], []>} : vector<16x32xbf16>, vector<32x32xbf16>, vector<16x32xf32> -> vector<16x32xf32>
    %17 = arith.addf %10, %16 : vector<16x32xf32>
    %18 = vector.extract_strided_slice %9 {offsets = [0, 1, 0], sizes = [2, 8, 32], strides = [1, 1, 1]} : vector<2x10x32xf32> to vector<2x8x32xf32>
    %19 = vector.shape_cast %18 : vector<2x8x32xf32> to vector<16x32xf32>
    %20 = arith.truncf %19 : vector<16x32xf32> to vector<16x32xbf16>
    %c1_21 = arith.constant 1 : index
    %c0_22 = arith.constant 0 : index
    %c0_23 = arith.constant 0 : index
    %21 = vector.load %arg2[%c1_21, %c0_22, %c0_23] : memref<3x32x32xbf16, #tpu.memory_space<vmem>>, vector<1x32x32xbf16>
    %22 = vector.shape_cast %21 : vector<1x32x32xbf16> to vector<32x32xbf16>
    %cst_24 = arith.constant dense<0.000000e+00> : vector<16x32xf32>
    %23 = tpu.matmul %20, %22, %cst_24 {dimension_numbers = #tpu.dot_dimension_numbers<[1], [0], [0], [1], [0, 0, 1, 1], [], []>} : vector<16x32xbf16>, vector<32x32xbf16>, vector<16x32xf32> -> vector<16x32xf32>
    %24 = arith.addf %17, %23 : vector<16x32xf32>
    %25 = vector.extract_strided_slice %9 {offsets = [0, 2, 0], sizes = [2, 8, 32], strides = [1, 1, 1]} : vector<2x10x32xf32> to vector<2x8x32xf32>
    %26 = vector.shape_cast %25 : vector<2x8x32xf32> to vector<16x32xf32>
    %27 = arith.truncf %26 : vector<16x32xf32> to vector<16x32xbf16>
    %c2 = arith.constant 2 : index
    %c0_25 = arith.constant 0 : index
    %c0_26 = arith.constant 0 : index
    %28 = vector.load %arg2[%c2, %c0_25, %c0_26] : memref<3x32x32xbf16, #tpu.memory_space<vmem>>, vector<1x32x32xbf16>
    %29 = vector.shape_cast %28 : vector<1x32x32xbf16> to vector<32x32xbf16>
    %cst_27 = arith.constant dense<0.000000e+00> : vector<16x32xf32>
    %30 = tpu.matmul %27, %29, %cst_27 {dimension_numbers = #tpu.dot_dimension_numbers<[1], [0], [0], [1], [0, 0, 1, 1], [], []>} : vector<16x32xbf16>, vector<32x32xbf16>, vector<16x32xf32> -> vector<16x32xf32>
    %31 = arith.addf %24, %30 : vector<16x32xf32>
    %32 = vector.broadcast %4 : vector<1x32xf32> to vector<16x32xf32>
    %33 = arith.addf %31, %32 : vector<16x32xf32>
    %cst_28 = arith.constant dense<0.000000e+00> : vector<16xf32>
    %34 = vector.multi_reduction <add>, %33, %cst_28 [1] : vector<16x32xf32> to vector<16xf32>
    %35 = vector.shape_cast %34 : vector<16xf32> to vector<16x1xf32>
    %cst_29 = arith.constant 3.200000e+01 : f32
    %36 = vector.broadcast %cst_29 : f32 to vector<16x1xf32>
    %37 = arith.divf %35, %36 : vector<16x1xf32>
    %38 = arith.mulf %33, %33 : vector<16x32xf32>
    %cst_30 = arith.constant dense<0.000000e+00> : vector<16xf32>
    %39 = vector.multi_reduction <add>, %38, %cst_30 [1] : vector<16x32xf32> to vector<16xf32>
    %40 = vector.shape_cast %39 : vector<16xf32> to vector<16x1xf32>
    %cst_31 = arith.constant 3.200000e+01 : f32
    %41 = vector.broadcast %cst_31 : f32 to vector<16x1xf32>
    %42 = arith.divf %40, %41 : vector<16x1xf32>
    %43 = arith.mulf %37, %37 : vector<16x1xf32>
    %44 = arith.subf %42, %43 : vector<16x1xf32>
    %45 = vector.broadcast %37 : vector<16x1xf32> to vector<16x32xf32>
    %46 = arith.subf %33, %45 : vector<16x32xf32>
    %cst_32 = arith.constant 9.99999974E-6 : f32
    %47 = vector.broadcast %cst_32 : f32 to vector<16x1xf32>
    %48 = arith.addf %44, %47 : vector<16x1xf32>
    %49 = math.rsqrt %48 : vector<16x1xf32>
    %50 = vector.broadcast %49 : vector<16x1xf32> to vector<16x32xf32>
    %51 = arith.mulf %46, %50 : vector<16x32xf32>
    %52 = vector.broadcast %5 : vector<1x32xf32> to vector<16x32xf32>
    %53 = arith.mulf %51, %52 : vector<16x32xf32>
    %54 = vector.broadcast %6 : vector<1x32xf32> to vector<16x32xf32>
    %55 = arith.addf %53, %54 : vector<16x32xf32>
    %c0_33 = arith.constant 0 : index
    %c0_34 = arith.constant 0 : index
    %56 = vector.load %arg7[%c0_33, %c0_34] : memref<1x32xf32, #tpu.memory_space<vmem>>, vector<1x32xf32>
    %c0_35 = arith.constant 0 : index
    %c0_36 = arith.constant 0 : index
    %57 = vector.load %arg8[%c0_35, %c0_36] : memref<1x32xf32, #tpu.memory_space<vmem>>, vector<1x32xf32>
    %c0_37 = arith.constant 0 : index
    %c0_38 = arith.constant 0 : index
    %58 = vector.load %arg9[%c0_37, %c0_38] : memref<1x32xf32, #tpu.memory_space<vmem>>, vector<1x32xf32>
    %59 = vector.shape_cast %55 : vector<16x32xf32> to vector<2x8x32xf32>
    %c0_39 = arith.constant 0 : index
    %c1_40 = arith.constant 1 : index
    %c0_41 = arith.constant 0 : index
    %60 = vector.load %arg13[%c0_39, %c1_40, %c0_41] : memref<2x10x32xf32, #tpu.memory_space<vmem>>, vector<2x8x32xf32>
    tpu.vector_store %arg13[%c0_39, %c1_40, %c0_41], %59 {strides = array<i32>} : memref<2x10x32xf32, #tpu.memory_space<vmem>>, vector<2x8x32xf32>,
    %c0_42 = arith.constant 0 : index
    %c0_43 = arith.constant 0 : index
    %c0_44 = arith.constant 0 : index
    %61 = vector.load %arg13[%c0_42, %c0_43, %c0_44] : memref<2x10x32xf32, #tpu.memory_space<vmem>>, vector<2x10x32xf32>
    %cst_45 = arith.constant 0.000000e+00 : f32
    %62 = vector.broadcast %cst_45 : f32 to vector<16x32xf32>
    %63 = vector.extract_strided_slice %61 {offsets = [0, 0, 0], sizes = [2, 8, 32], strides = [1, 1, 1]} : vector<2x10x32xf32> to vector<2x8x32xf32>
    %64 = vector.shape_cast %63 : vector<2x8x32xf32> to vector<16x32xf32>
    %65 = arith.truncf %64 : vector<16x32xf32> to vector<16x32xbf16>
    %c0_46 = arith.constant 0 : index
    %c0_47 = arith.constant 0 : index
    %c0_48 = arith.constant 0 : index
    %66 = vector.load %arg6[%c0_46, %c0_47, %c0_48] : memref<3x32x32xbf16, #tpu.memory_space<vmem>>, vector<1x32x32xbf16>
    %67 = vector.shape_cast %66 : vector<1x32x32xbf16> to vector<32x32xbf16>
    %cst_49 = arith.constant dense<0.000000e+00> : vector<16x32xf32>
    %68 = tpu.matmul %65, %67, %cst_49 {dimension_numbers = #tpu.dot_dimension_numbers<[1], [0], [0], [1], [0, 0, 1, 1], [], []>} : vector<16x32xbf16>, vector<32x32xbf16>, vector<16x32xf32> -> vector<16x32xf32>
    %69 = arith.addf %62, %68 : vector<16x32xf32>
    %70 = vector.extract_strided_slice %61 {offsets = [0, 1, 0], sizes = [2, 8, 32], strides = [1, 1, 1]} : vector<2x10x32xf32> to vector<2x8x32xf32>
    %71 = vector.shape_cast %70 : vector<2x8x32xf32> to vector<16x32xf32>
    %72 = arith.truncf %71 : vector<16x32xf32> to vector<16x32xbf16>
    %c1_50 = arith.constant 1 : index
    %c0_51 = arith.constant 0 : index
    %c0_52 = arith.constant 0 : index
    %73 = vector.load %arg6[%c1_50, %c0_51, %c0_52] : memref<3x32x32xbf16, #tpu.memory_space<vmem>>, vector<1x32x32xbf16>
    %74 = vector.shape_cast %73 : vector<1x32x32xbf16> to vector<32x32xbf16>
    %cst_53 = arith.constant dense<0.000000e+00> : vector<16x32xf32>
    %75 = tpu.matmul %72, %74, %cst_53 {dimension_numbers = #tpu.dot_dimension_numbers<[1], [0], [0], [1], [0, 0, 1, 1], [], []>} : vector<16x32xbf16>, vector<32x32xbf16>, vector<16x32xf32> -> vector<16x32xf32>
    %76 = arith.addf %69, %75 : vector<16x32xf32>
    %77 = vector.extract_strided_slice %61 {offsets = [0, 2, 0], sizes = [2, 8, 32], strides = [1, 1, 1]} : vector<2x10x32xf32> to vector<2x8x32xf32>
    %78 = vector.shape_cast %77 : vector<2x8x32xf32> to vector<16x32xf32>
    %79 = arith.truncf %78 : vector<16x32xf32> to vector<16x32xbf16>
    %c2_54 = arith.constant 2 : index
    %c0_55 = arith.constant 0 : index
    %c0_56 = arith.constant 0 : index
    %80 = vector.load %arg6[%c2_54, %c0_55, %c0_56] : memref<3x32x32xbf16, #tpu.memory_space<vmem>>, vector<1x32x32xbf16>
    %81 = vector.shape_cast %80 : vector<1x32x32xbf16> to vector<32x32xbf16>
    %cst_57 = arith.constant dense<0.000000e+00> : vector<16x32xf32>
    %82 = tpu.matmul %79, %81, %cst_57 {dimension_numbers = #tpu.dot_dimension_numbers<[1], [0], [0], [1], [0, 0, 1, 1], [], []>} : vector<16x32xbf16>, vector<32x32xbf16>, vector<16x32xf32> -> vector<16x32xf32>
    %83 = arith.addf %76, %82 : vector<16x32xf32>
    %84 = vector.broadcast %56 : vector<1x32xf32> to vector<16x32xf32>
    %85 = arith.addf %83, %84 : vector<16x32xf32>
    %cst_58 = arith.constant dense<0.000000e+00> : vector<16xf32>
    %86 = vector.multi_reduction <add>, %85, %cst_58 [1] : vector<16x32xf32> to vector<16xf32>
    %87 = vector.shape_cast %86 : vector<16xf32> to vector<16x1xf32>
    %cst_59 = arith.constant 3.200000e+01 : f32
    %88 = vector.broadcast %cst_59 : f32 to vector<16x1xf32>
    %89 = arith.divf %87, %88 : vector<16x1xf32>
    %90 = arith.mulf %85, %85 : vector<16x32xf32>
    %cst_60 = arith.constant dense<0.000000e+00> : vector<16xf32>
    %91 = vector.multi_reduction <add>, %90, %cst_60 [1] : vector<16x32xf32> to vector<16xf32>
    %92 = vector.shape_cast %91 : vector<16xf32> to vector<16x1xf32>
    %cst_61 = arith.constant 3.200000e+01 : f32
    %93 = vector.broadcast %cst_61 : f32 to vector<16x1xf32>
    %94 = arith.divf %92, %93 : vector<16x1xf32>
    %95 = arith.mulf %89, %89 : vector<16x1xf32>
    %96 = arith.subf %94, %95 : vector<16x1xf32>
    %97 = vector.broadcast %89 : vector<16x1xf32> to vector<16x32xf32>
    %98 = arith.subf %85, %97 : vector<16x32xf32>
    %cst_62 = arith.constant 9.99999974E-6 : f32
    %99 = vector.broadcast %cst_62 : f32 to vector<16x1xf32>
    %100 = arith.addf %96, %99 : vector<16x1xf32>
    %101 = math.rsqrt %100 : vector<16x1xf32>
    %102 = vector.broadcast %101 : vector<16x1xf32> to vector<16x32xf32>
    %103 = arith.mulf %98, %102 : vector<16x32xf32>
    %104 = vector.broadcast %57 : vector<1x32xf32> to vector<16x32xf32>
    %105 = arith.mulf %103, %104 : vector<16x32xf32>
    %106 = vector.broadcast %58 : vector<1x32xf32> to vector<16x32xf32>
    %107 = arith.addf %105, %106 : vector<16x32xf32>
    %108 = vector.shape_cast %107 : vector<16x32xf32> to vector<2x8x32xf32>
    %c0_63 = arith.constant 0 : index
    %c0_64 = arith.constant 0 : index
    %109 = vector.load %arg10[%c0_63, %c0_64] : memref<1x32xf32, #tpu.memory_space<vmem>>, vector<1x32xf32>
    %110 = vector.shape_cast %109 : vector<1x32xf32> to vector<1x1x32xf32>
    %111 = vector.broadcast %110 : vector<1x1x32xf32> to vector<2x8x32xf32>
    %112 = arith.mulf %108, %111 : vector<2x8x32xf32>
    %cst_65 = arith.constant dense<0.000000e+00> : vector<2x8xf32>
    %113 = vector.multi_reduction <add>, %112, %cst_65 [2] : vector<2x8x32xf32> to vector<2x8xf32>
    %c0_66 = arith.constant 0 : index
    %c0_67 = arith.constant 0 : index
    %114 = vector.load %arg11[%c0_66, %c0_67] : memref<1x1xf32, #tpu.memory_space<vmem>>, vector<1x1xf32>
    %115 = vector.broadcast %114 : vector<1x1xf32> to vector<2x8xf32>
    %116 = arith.addf %113, %115 : vector<2x8xf32>
    %117 = vector.shape_cast %116 : vector<2x8xf32> to vector<2x1x8xf32>
    %c0_68 = arith.constant 0 : index
    %c0_69 = arith.constant 0 : index
    %c0_70 = arith.constant 0 : index
    %118 = vector.load %arg12[%c0_68, %c0_69, %c0_70] : memref<2x1x8xf32, #tpu.memory_space<vmem>>, vector<2x1x8xf32>
    tpu.vector_store %arg12[%c0_68, %c0_69, %c0_70], %117 {strides = array<i32>} : memref<2x1x8xf32, #tpu.memory_space<vmem>>, vector<2x1x8xf32>,
    return
  }
  func.func @transform_0(%arg0: i32) -> (i32, i32, i32) {
    %c0_i32 = arith.constant 0 : i32
    %c0_i32_0 = arith.constant 0 : i32
    %c0_i32_1 = arith.constant 0 : i32
    return %arg0, %c0_i32, %c0_i32_0 : i32, i32, i32
  }
  func.func @transform_1(%arg0: i32) -> (i32, i32, i32) {
    %c0_i32 = arith.constant 0 : i32
    %c0_i32_0 = arith.constant 0 : i32
    %c0_i32_1 = arith.constant 0 : i32
    %c0_i32_2 = arith.constant 0 : i32
    return %c0_i32, %c0_i32_0, %c0_i32_1 : i32, i32, i32
  }
  func.func @transform_2(%arg0: i32) -> (i32, i32) {
    %c0_i32 = arith.constant 0 : i32
    %c0_i32_0 = arith.constant 0 : i32
    %c0_i32_1 = arith.constant 0 : i32
    return %c0_i32, %c0_i32_0 : i32, i32
  }
  func.func @transform_3(%arg0: i32) -> (i32, i32) {
    %c0_i32 = arith.constant 0 : i32
    %c0_i32_0 = arith.constant 0 : i32
    %c0_i32_1 = arith.constant 0 : i32
    return %c0_i32, %c0_i32_0 : i32, i32
  }
  func.func @transform_4(%arg0: i32) -> (i32, i32) {
    %c0_i32 = arith.constant 0 : i32
    %c0_i32_0 = arith.constant 0 : i32
    %c0_i32_1 = arith.constant 0 : i32
    return %c0_i32, %c0_i32_0 : i32, i32
  }
  func.func @transform_5(%arg0: i32) -> (i32, i32, i32) {
    %c0_i32 = arith.constant 0 : i32
    %c0_i32_0 = arith.constant 0 : i32
    %c0_i32_1 = arith.constant 0 : i32
    %c0_i32_2 = arith.constant 0 : i32
    return %c0_i32, %c0_i32_0, %c0_i32_1 : i32, i32, i32
  }
  func.func @transform_6(%arg0: i32) -> (i32, i32) {
    %c0_i32 = arith.constant 0 : i32
    %c0_i32_0 = arith.constant 0 : i32
    %c0_i32_1 = arith.constant 0 : i32
    return %c0_i32, %c0_i32_0 : i32, i32
  }
  func.func @transform_7(%arg0: i32) -> (i32, i32) {
    %c0_i32 = arith.constant 0 : i32
    %c0_i32_0 = arith.constant 0 : i32
    %c0_i32_1 = arith.constant 0 : i32
    return %c0_i32, %c0_i32_0 : i32, i32
  }
  func.func @transform_8(%arg0: i32) -> (i32, i32) {
    %c0_i32 = arith.constant 0 : i32
    %c0_i32_0 = arith.constant 0 : i32
    %c0_i32_1 = arith.constant 0 : i32
    return %c0_i32, %c0_i32_0 : i32, i32
  }
  func.func @transform_9(%arg0: i32) -> (i32, i32) {
    %c0_i32 = arith.constant 0 : i32
    %c0_i32_0 = arith.constant 0 : i32
    %c0_i32_1 = arith.constant 0 : i32
    return %c0_i32, %c0_i32_0 : i32, i32
  }
  func.func @transform_10(%arg0: i32) -> (i32, i32) {
    %c0_i32 = arith.constant 0 : i32
    %c0_i32_0 = arith.constant 0 : i32
    %c0_i32_1 = arith.constant 0 : i32
    return %c0_i32, %c0_i32_0 : i32, i32
  }
  func.func @transform_11(%arg0: i32) -> (i32, i32, i32) {
    %c0_i32 = arith.constant 0 : i32
    %c0_i32_0 = arith.constant 0 : i32
    %c0_i32_1 = arith.constant 0 : i32
    return %arg0, %c0_i32, %c0_i32_0 : i32, i32, i32
  }
}

</mosaic_0001>

<llo_original>
// kernel: tpu_custom_call.1
$region0: #{tpu_custom_call.1}
  #allocation0 [shape = 'u32[]', space=smem, size = 0x4, offset = 0x4, fixed_abs, tag = 'smem constant byte address 0x4 - core index']
  #allocation1 [shape = 'u32[144,128]{1,0:T(1,128)}', space=vmem, size = 0x12000, scoped, tag = 'internal scratch']
  #allocation2 [shape = 'f32[2,10,32]{2,1,0:T(8,128)}', space=vmem, size = 0x4000, scoped, tag = 'scratch operand']
  #allocation3 [shape = 'f32[1,1]{1,0:T(1,128)S(1)}', space=vmem, size = 0x200, scoped, tag = 'scoped memory for tpu_custom_call.1']
  %s0 = inlined_call_operand.hbm [shape: f32[2,8,32], index: 0, kind: input, shape index: {}]
  %s1 = inlined_call_operand.hbm [shape: bf16[3,32,32], index: 1, kind: input, shape index: {}]
  %s2 = inlined_call_operand.vmem [shape: f32[1,32], index: 2, kind: input, shape index: {}]
  %s3 = inlined_call_operand.vmem [shape: f32[1,32], index: 3, kind: input, shape index: {}]
  %s4 = inlined_call_operand.vmem [shape: f32[1,32], index: 4, kind: input, shape index: {}]
  %s5 = inlined_call_operand.hbm [shape: bf16[3,32,32], index: 5, kind: input, shape index: {}]
  %s6 = inlined_call_operand.vmem [shape: f32[1,32], index: 6, kind: input, shape index: {}]
  %s7 = inlined_call_operand.vmem [shape: f32[1,32], index: 7, kind: input, shape index: {}]
  %s8 = inlined_call_operand.vmem [shape: f32[1,32], index: 8, kind: input, shape index: {}]
  %s9 = inlined_call_operand.vmem [shape: f32[1,32], index: 9, kind: input, shape index: {}]
  %s10 = inlined_call_operand.<no memory space> [shape: f32[1,1], index: 10, kind: input, shape index: {}]
  %s11 = inlined_call_operand.hbm [shape: f32[2,1,8], index: 11, kind: output, shape index: {}]
  %s12 = sld [smem:[#allocation0]]
  $region66: #{tpu_custom_call.1} parent=0
    _
  %s14 = ssub.s32 1, %s12
  %s15 = scalar_select 0, %s14, %s12
  %v16 = vstv %s10
  %17 = vst [vmem:[#allocation3] sm:$0x1] %v16
  $region1: #{tpu_custom_call.1} parent=0
    #allocation4 [shape = 'u8[8192]{0}', space=vmem, size = 0x2000, scoped, tag = 'input window, operand 0, single buffered']
    #allocation5 [shape = 's32[1]{0}', space=sflag, size = 0x4, scoped, tag = 'scoped memory for tpu_custom_call.1']
    #allocation6 [shape = 's32[1]{0}', space=sflag, size = 0x4, scoped, tag = 'scoped memory for tpu_custom_call.1']
    #allocation7 [shape = 'u8[24576]{0}', space=vmem, size = 0x6000, scoped, tag = 'input window, operand 1, single buffered']
    #allocation8 [shape = 's32[1]{0}', space=sflag, size = 0x4, scoped, tag = 'scoped memory for tpu_custom_call.1']
    #allocation9 [shape = 'u8[24576]{0}', space=vmem, size = 0x6000, scoped, tag = 'input window, operand 5, single buffered']
    #allocation10 [shape = 'u8[1024]{0}', space=vmem, size = 0x400, scoped, tag = 'output window, operand 0, single buffered']
    %18 = vsyncpa [#allocation5], 0
    %19 = vsyncpa [#allocation8], 0
    %20 = vsyncpa [#allocation6], 0
    // Predicated region
    $region2: #{tpu_custom_call.1} parent=1 // pred_check
      _
    $region3: #{tpu_custom_call.1} parent=1 // pred_check_branch
      %22 = sbr.rel (0) target = $region5
    $region4: #{tpu_custom_call.1} parent=1 // pred_region
      %s24 = ssub.s32 256, 256
      %25 = vsyncadd [#allocation5], %s24
      %s26 = sshll.u32 [#allocation4], 4
      %s27 = int_to_ptr.vmem [resolvable:$true] %s26
      %32 = dma.hbm_to_vmem [thread:$0]  %s0, 256, %s27, [#allocation5], 128, 128, 8
    $region5: #{tpu_custom_call.1} parent=1 // pred_fallthru
      _
    // Predicated region
    $region6: #{tpu_custom_call.1} parent=1 // pred_check
      _
    $region7: #{tpu_custom_call.1} parent=1 // pred_check_branch
      %34 = sbr.rel (0) target = $region9
    $region8: #{tpu_custom_call.1} parent=1 // pred_region
      %s36 = ssub.s32 768, 768
      %37 = vsyncadd [#allocation8], %s36
      %s38 = sshll.u32 [#allocation7], 4
      %s39 = int_to_ptr.vmem [resolvable:$true] %s38
      %44 = dma.hbm_to_vmem [thread:$0]  %s1, 768, %s39, [#allocation8], 64, 64, 4
    $region9: #{tpu_custom_call.1} parent=1 // pred_fallthru
      _
    // Predicated region
    $region10: #{tpu_custom_call.1} parent=1 // pred_check
      _
    $region11: #{tpu_custom_call.1} parent=1 // pred_check_branch
      %46 = sbr.rel (0) target = $region13
    $region12: #{tpu_custom_call.1} parent=1 // pred_region
      _
    $region13: #{tpu_custom_call.1} parent=1 // pred_fallthru
      _
    // Predicated region
    $region14: #{tpu_custom_call.1} parent=1 // pred_check
      _
    $region15: #{tpu_custom_call.1} parent=1 // pred_check_branch
      %48 = sbr.rel (0) target = $region17
    $region16: #{tpu_custom_call.1} parent=1 // pred_region
      _
    $region17: #{tpu_custom_call.1} parent=1 // pred_fallthru
      _
    // Predicated region
    $region18: #{tpu_custom_call.1} parent=1 // pred_check
      _
    $region19: #{tpu_custom_call.1} parent=1 // pred_check_branch
      %50 = sbr.rel (0) target = $region21
    $region20: #{tpu_custom_call.1} parent=1 // pred_region
      _
    $region21: #{tpu_custom_call.1} parent=1 // pred_fallthru
      _
    // Predicated region
    $region22: #{tpu_custom_call.1} parent=1 // pred_check
      _
    $region23: #{tpu_custom_call.1} parent=1 // pred_check_branch
      %52 = sbr.rel (0) target = $region25
    $region24: #{tpu_custom_call.1} parent=1 // pred_region
      %s54 = ssub.s32 768, 768
      %55 = vsyncadd [#allocation8], %s54
      %s56 = sshll.u32 [#allocation9], 4
      %s57 = int_to_ptr.vmem [resolvable:$true] %s56
      %62 = dma.hbm_to_vmem [thread:$0]  %s5, 768, %s57, [#allocation8], 64, 64, 4
    $region25: #{tpu_custom_call.1} parent=1 // pred_fallthru
      _
    // Predicated region
    $region26: #{tpu_custom_call.1} parent=1 // pred_check
      _
    $region27: #{tpu_custom_call.1} parent=1 // pred_check_branch
      %64 = sbr.rel (0) target = $region29
    $region28: #{tpu_custom_call.1} parent=1 // pred_region
      _
    $region29: #{tpu_custom_call.1} parent=1 // pred_fallthru
      _
    // Predicated region
    $region30: #{tpu_custom_call.1} parent=1 // pred_check
      _
    $region31: #{tpu_custom_call.1} parent=1 // pred_check_branch
      %66 = sbr.rel (0) target = $region33
    $region32: #{tpu_custom_call.1} parent=1 // pred_region
      _
    $region33: #{tpu_custom_call.1} parent=1 // pred_fallthru
      _
    // Predicated region
    $region34: #{tpu_custom_call.1} parent=1 // pred_check
      _
    $region35: #{tpu_custom_call.1} parent=1 // pred_check_branch
      %68 = sbr.rel (0) target = $region37
    $region36: #{tpu_custom_call.1} parent=1 // pred_region
      _
    $region37: #{tpu_custom_call.1} parent=1 // pred_fallthru
      _
    // Predicated region
    $region38: #{tpu_custom_call.1} parent=1 // pred_check
      _
    $region39: #{tpu_custom_call.1} parent=1 // pred_check_branch
      %70 = sbr.rel (0) target = $region41
    $region40: #{tpu_custom_call.1} parent=1 // pred_region
      _
    $region41: #{tpu_custom_call.1} parent=1 // pred_fallthru
      _
    // Predicated region
    $region42: #{tpu_custom_call.1} parent=1 // pred_check
      _
    $region43: #{tpu_custom_call.1} parent=1 // pred_check_branch
      %72 = sbr.rel (0) target = $region45
    $region44: #{tpu_custom_call.1} parent=1 // pred_region
      _
    $region45: #{tpu_custom_call.1} parent=1 // pred_fallthru
      _
    // Predicated region
    $region46: #{tpu_custom_call.1} parent=1 // pred_check
      _
    $region47: #{tpu_custom_call.1} parent=1 // pred_check_branch
      %74 = sbr.rel (0) target = $region49
    $region48: #{tpu_custom_call.1} parent=1 // pred_region
      %75 = dma.done [#allocation5], 256
    $region49: #{tpu_custom_call.1} parent=1 // pred_fallthru
      _
    // Predicated region
    $region50: #{tpu_custom_call.1} parent=1 // pred_check
      _
    $region51: #{tpu_custom_call.1} parent=1 // pred_check_branch
      %77 = sbr.rel (0) target = $region53
    $region52: #{tpu_custom_call.1} parent=1 // pred_region
      %78 = dma.done [#allocation8], 768
    $region53: #{tpu_custom_call.1} parent=1 // pred_fallthru
      _
    // Predicated region
    $region54: #{tpu_custom_call.1} parent=1 // pred_check
      _
    $region55: #{tpu_custom_call.1} parent=1 // pred_check_branch
      %80 = sbr.rel (0) target = $region57
    $region56: #{tpu_custom_call.1} parent=1 // pred_region
      %81 = dma.done [#allocation8], 768
    $region57: #{tpu_custom_call.1} parent=1 // pred_fallthru
      _
    %vm83 = vcmask 261120
    %84 = vst.msk [vmem:[#allocation2] sm:$0xff] %vm83, 0.0
    %vm85 = vcmask 254976
    %86 = vst.msk [vmem:[#allocation2 + $0x8] sm:$0x3] %vm85, 0.0
    %87 = vst.msk [vmem:[#allocation2 + $0x10] sm:$0xff] %vm83, 0.0
    %88 = vst.msk [vmem:[#allocation2 + $0x18] sm:$0x3] %vm85, 0.0
    %v89 = vld [vmem:[#allocation4] sm:$0xff]
    %v90 = vld [vmem:[#allocation4 + $0x8] sm:$0xff]
    %v91 = vld [vmem:[%s2] sm:$0x1]
    %v92 = vld [vmem:[%s3] sm:$0x1]
    %v93 = vld [vmem:[%s4] sm:$0x1]
    %94 = vst.msk [vmem:[#allocation2 + $0x1] sm:$0xff] %vm83, %v89
    %95 = vst.msk [vmem:[#allocation2 + $0x11] sm:$0xff] %vm83, %v90
    %v96 = vld [vmem:[#allocation2] sm:$0xff]
    %v97 = vld [vmem:[#allocation2 + $0x8] sm:$0x3]
    %v98 = vld [vmem:[#allocation2 + $0x10] sm:$0xff]
    %v99 = vld [vmem:[#allocation2 + $0x18] sm:$0x3]
    %v100 = vpack.c.bf16 %v98, %v96
    %v101 = vld [vmem:[#allocation7] sm:$0xf]
    %v102 = vld [vmem:[#allocation7 + $0x4] sm:$0xf]
    %v103 = vld [vmem:[#allocation7 + $0x8] sm:$0xf]
    %v104 = vld [vmem:[#allocation7 + $0xc] sm:$0xf]
    %vm109 = vcmask 1046528
    %v110 = vrot.slane %v96, 1
    %v111 = vrot.slane %v97, 1
    %v112 = vsel %vm109, %v110, %v111
    %v113 = vrot.slane %v98, 1
    %v114 = vrot.slane %v99, 1
    %v115 = vsel %vm109, %v113, %v114
    %v118 = vpack.c.bf16 %v115, %v112
    %s119 = scalar_lea.vmem [#allocation7], 16
    %v120 = vld [vmem:[%s119] sm:$0xf]
    %v121 = vld [vmem:[%s119 + $0x4] sm:$0xf]
    %v122 = vld [vmem:[%s119 + $0x8] sm:$0xf]
    %v123 = vld [vmem:[%s119 + $0xc] sm:$0xf]
    %v128 = vunpack.c.l.b16 %v120
    %v129 = vunpack.c.l.b16 %v121
    %v130 = vunpack.c.l.b16 %v122
    %v131 = vunpack.c.l.b16 %v123
    %v132 = vpack.c.b16 %v129, %v128
    %v133 = vpack.c.b16 %v131, %v130
    %v137 = vsel %vm83, %v118, 0
    %139 = vmatprep.subr.bf16.mxu0 0
    %140 = vmatpush1.bf16.msra.mxu0 %v132
    %141 = vmatprep.subr.bf16.mxu0 0
    %142 = vmatpush1.bf16.msra.mxu0 %v133
    %143 = vmatprep.subr.bf16.mxu0 0
    %144 = vmatpush1.bf16.msra.mxu0 0
    %145 = vmatprep.subr.bf16.mxu0 0
    %146 = vmatpush1.bf16.msra.mxu0 0
    %147 = vmatprep.subr.bf16.mxu0 0
    %148 = vmatpush1.bf16.msra.mxu0 0
    %149 = vmatprep.subr.bf16.mxu0 0
    %150 = vmatpush1.bf16.msra.mxu0 0
    %151 = vmatprep.subr.bf16.mxu0 0
    %152 = vmatpush1.bf16.msra.mxu0 0
    %153 = vmatprep.subr.bf16.mxu0 0
    %154 = vmatpush1.bf16.msra.mxu0 0
    %155 = vmatprep.subr.bf16.mxu0 0
    %156 = vmatpush1.bf16.msra.mxu0 0
    %157 = vmatprep.subr.bf16.mxu0 0
    %158 = vmatpush1.bf16.msra.mxu0 0
    %159 = vmatprep.subr.bf16.mxu0 0
    %160 = vmatpush1.bf16.msra.mxu0 0
    %161 = vmatprep.subr.bf16.mxu0 0
    %162 = vmatpush1.bf16.msra.mxu0 0
    %163 = vmatprep.subr.bf16.mxu0 0
    %164 = vmatpush1.bf16.msra.mxu0 0
    %165 = vmatprep.subr.bf16.mxu0 0
    %166 = vmatpush1.bf16.msra.mxu0 0
    %167 = vmatprep.subr.bf16.mxu0 0
    %168 = vmatpush1.bf16.msra.mxu0 0
    %169 = vmatprep.subr.bf16.mxu0 0
    %170 = vmatpush1.bf16.msra.mxu0 0
    %171 = vmatprep.mubr.bf16.mxu0 0
    %172 = vmatmul.mubr.bf16.gmra.mrb[0].mxu0 %v137
    %v173 = vpop.f32.mrb[0].mxu0
    %v174 = vadd.f32 0.0, %v173
    %v175 = vpop.f32.mrb[0].mxu0
    %v176 = vpop.f32.mrb[0].mxu0
    %v177 = vadd.f32 0.0, %v176
    %v178 = vpop.f32.mrb[0].mxu0
    %179 = vdwg.mxu0
    %v184 = vunpack.c.l.b16 %v101
    %v185 = vunpack.c.l.b16 %v102
    %v186 = vunpack.c.l.b16 %v103
    %v187 = vunpack.c.l.b16 %v104
    %v188 = vpack.c.b16 %v185, %v184
    %v189 = vpack.c.b16 %v187, %v186
    %v193 = vsel %vm83, %v100, 0
    %195 = vmatprep.subr.bf16.mxu0 0
    %196 = vmatpush1.bf16.msra.mxu0 %v188
    %197 = vmatprep.subr.bf16.mxu0 0
    %198 = vmatpush1.bf16.msra.mxu0 %v189
    %199 = vmatprep.subr.bf16.mxu0 0
    %200 = vmatpush1.bf16.msra.mxu0 0
    %201 = vmatprep.subr.bf16.mxu0 0
    %202 = vmatpush1.bf16.msra.mxu0 0
    %203 = vmatprep.subr.bf16.mxu0 0
    %204 = vmatpush1.bf16.msra.mxu0 0
    %205 = vmatprep.subr.bf16.mxu0 0
    %206 = vmatpush1.bf16.msra.mxu0 0
    %207 = vmatprep.subr.bf16.mxu0 0
    %208 = vmatpush1.bf16.msra.mxu0 0
    %209 = vmatprep.subr.bf16.mxu0 0
    %210 = vmatpush1.bf16.msra.mxu0 0
    %211 = vmatprep.subr.bf16.mxu0 0
    %212 = vmatpush1.bf16.msra.mxu0 0
    %213 = vmatprep.subr.bf16.mxu0 0
    %214 = vmatpush1.bf16.msra.mxu0 0
    %215 = vmatprep.subr.bf16.mxu0 0
    %216 = vmatpush1.bf16.msra.mxu0 0
    %217 = vmatprep.subr.bf16.mxu0 0
    %218 = vmatpush1.bf16.msra.mxu0 0
    %219 = vmatprep.subr.bf16.mxu0 0
    %220 = vmatpush1.bf16.msra.mxu0 0
    %221 = vmatprep.subr.bf16.mxu0 0
    %222 = vmatpush1.bf16.msra.mxu0 0
    %223 = vmatprep.subr.bf16.mxu0 0
    %224 = vmatpush1.bf16.msra.mxu0 0
    %225 = vmatprep.subr.bf16.mxu0 0
    %226 = vmatpush1.bf16.msra.mxu0 0
    %227 = vmatprep.mubr.bf16.mxu0 0
    %228 = vmatmul.mubr.bf16.gmra.mrb[0].mxu0 %v193
    %v229 = vpop.f32.mrb[0].mxu0
    %v230 = vadd.f32 %v174, %v229
    %v231 = vpop.f32.mrb[0].mxu0
    %v232 = vpop.f32.mrb[0].mxu0
    %v233 = vadd.f32 %v177, %v232
    %v234 = vpop.f32.mrb[0].mxu0
    %235 = vdwg.mxu0
    %vm236 = vcmask 1045504
    %v237 = vrot.slane %v96, 2
    %v238 = vrot.slane %v97, 2
    %v239 = vsel %vm236, %v237, %v238
    %v240 = vrot.slane %v98, 2
    %v241 = vrot.slane %v99, 2
    %v242 = vsel %vm236, %v240, %v241
    %v245 = vpack.c.bf16 %v242, %v239
    %s246 = scalar_lea.vmem [#allocation7], 32
    %v247 = vld [vmem:[%s246] sm:$0xf]
    %v248 = vld [vmem:[%s246 + $0x4] sm:$0xf]
    %v249 = vld [vmem:[%s246 + $0x8] sm:$0xf]
    %v250 = vld [vmem:[%s246 + $0xc] sm:$0xf]
    %v255 = vunpack.c.l.b16 %v247
    %v256 = vunpack.c.l.b16 %v248
    %v257 = vunpack.c.l.b16 %v249
    %v258 = vunpack.c.l.b16 %v250
    %v259 = vpack.c.b16 %v256, %v255
    %v260 = vpack.c.b16 %v258, %v257
    %v264 = vsel %vm83, %v245, 0
    %266 = vmatprep.subr.bf16.mxu0 0
    %267 = vmatpush1.bf16.msra.mxu0 %v259
    %268 = vmatprep.subr.bf16.mxu0 0
    %269 = vmatpush1.bf16.msra.mxu0 %v260
    %270 = vmatprep.subr.bf16.mxu0 0
    %271 = vmatpush1.bf16.msra.mxu0 0
    %272 = vmatprep.subr.bf16.mxu0 0
    %273 = vmatpush1.bf16.msra.mxu0 0
    %274 = vmatprep.subr.bf16.mxu0 0
    %275 = vmatpush1.bf16.msra.mxu0 0
    %276 = vmatprep.subr.bf16.mxu0 0
    %277 = vmatpush1.bf16.msra.mxu0 0
    %278 = vmatprep.subr.bf16.mxu0 0
    %279 = vmatpush1.bf16.msra.mxu0 0
    %280 = vmatprep.subr.bf16.mxu0 0
    %281 = vmatpush1.bf16.msra.mxu0 0
    %282 = vmatprep.subr.bf16.mxu0 0
    %283 = vmatpush1.bf16.msra.mxu0 0
    %284 = vmatprep.subr.bf16.mxu0 0
    %285 = vmatpush1.bf16.msra.mxu0 0
    %286 = vmatprep.subr.bf16.mxu0 0
    %287 = vmatpush1.bf16.msra.mxu0 0
    %288 = vmatprep.subr.bf16.mxu0 0
    %289 = vmatpush1.bf16.msra.mxu0 0
    %290 = vmatprep.subr.bf16.mxu0 0
    %291 = vmatpush1.bf16.msra.mxu0 0
    %292 = vmatprep.subr.bf16.mxu0 0
    %293 = vmatpush1.bf16.msra.mxu0 0
    %294 = vmatprep.subr.bf16.mxu0 0
    %295 = vmatpush1.bf16.msra.mxu0 0
    %296 = vmatprep.subr.bf16.mxu0 0
    %297 = vmatpush1.bf16.msra.mxu0 0
    %298 = vmatprep.mubr.bf16.mxu0 0
    %299 = vmatmul.mubr.bf16.gmra.mrb[0].mxu0 %v264
    %v300 = vpop.f32.mrb[0].mxu0
    %v301 = vadd.f32 0.0, %v300
    %v302 = vpop.f32.mrb[0].mxu0
    %v303 = vpop.f32.mrb[0].mxu0
    %v304 = vadd.f32 0.0, %v303
    %v305 = vpop.f32.mrb[0].mxu0
    %306 = vdwg.mxu0
    %v307 = vadd.f32 %v230, %v301
    %v308 = vadd.f32 %v233, %v304
    %v310 = vlaneseq
    %v311 = vshrl.u32 %v310, 7
    %v312 = vsub.s32 0, %v311
    %v313 = vrot.slane %v91, %v312
    %v315 = vadd.f32 %v307, %v313
    %v316 = vadd.f32 %v308, %v313
    %v317 = vsel %vm83, %v315, 0.0
    %318 = vadd.xlane.f32.xlu0 %v317
    %v319 = vpop.xlane.xlu0 %318
    %v320 = vsel %vm83, %v316, 0.0
    %321 = vadd.xlane.f32.xlu0 %v320
    %v322 = vpop.xlane.xlu0 %321
    %v323 = vrcp.pop 32.0
    %v324 = vmul.f32 %v319, %v323
    %v325 = vmul.f32 %v322, %v323
    %v326 = vmul.f32 %v315, %v315
    %v327 = vmul.f32 %v316, %v316
    %v328 = vsel %vm83, %v326, 0.0
    %329 = vadd.xlane.f32.xlu0 %v328
    %v330 = vpop.xlane.xlu0 %329
    %v331 = vsel %vm83, %v327, 0.0
    %332 = vadd.xlane.f32.xlu0 %v331
    %v333 = vpop.xlane.xlu0 %332
    %v334 = vmul.f32 %v330, %v323
    %v335 = vmul.f32 %v333, %v323
    %v336 = vmul.f32 %v324, %v324
    %v337 = vmul.f32 %v325, %v325
    %v338 = vsub.f32 %v334, %v336
    %v339 = vsub.f32 %v335, %v337
    %v340 = vsub.f32 %v315, %v324
    %v341 = vsub.f32 %v316, %v325
    %v342 = vadd.f32 %v338, 1e-05
    %v343 = vadd.f32 %v339, 1e-05
    %v344 = vrsqrt.pop %v342
    %v345 = vrsqrt.pop %v343
    %v346 = vmul.f32 %v340, %v344
    %v347 = vmul.f32 %v341, %v345
    %v349 = vlaneseq
    %v350 = vshrl.u32 %v349, 7
    %v351 = vsub.s32 0, %v350
    %v352 = vrot.slane %v92, %v351
    %v354 = vmul.f32 %v346, %v352
    %v355 = vmul.f32 %v347, %v352
    %v357 = vlaneseq
    %v358 = vshrl.u32 %v357, 7
    %v359 = vsub.s32 0, %v358
    %v360 = vrot.slane %v93, %v359
    %v362 = vadd.f32 %v354, %v360
    %v363 = vadd.f32 %v355, %v360
    %v364 = vld [vmem:[%s6] sm:$0x1]
    %v365 = vld [vmem:[%s7] sm:$0x1]
    %v366 = vld [vmem:[%s8] sm:$0x1]
    %367 = vst.msk [vmem:[#allocation2 + $0x1] sm:$0xff] %vm83, %v362
    %368 = vst.msk [vmem:[#allocation2 + $0x11] sm:$0xff] %vm83, %v363
    %v369 = vld [vmem:[#allocation2] sm:$0xff]
    %v370 = vld [vmem:[#allocation2 + $0x8] sm:$0x3]
    %v371 = vld [vmem:[#allocation2 + $0x10] sm:$0xff]
    %v372 = vld [vmem:[#allocation2 + $0x18] sm:$0x3]
    %v373 = vpack.c.bf16 %v371, %v369
    %v374 = vld [vmem:[#allocation9] sm:$0xf]
    %v375 = vld [vmem:[#allocation9 + $0x4] sm:$0xf]
    %v376 = vld [vmem:[#allocation9 + $0x8] sm:$0xf]
    %v377 = vld [vmem:[#allocation9 + $0xc] sm:$0xf]
    %v382 = vrot.slane %v369, 1
    %v383 = vrot.slane %v370, 1
    %v384 = vsel %vm109, %v382, %v383
    %v385 = vrot.slane %v371, 1
    %v386 = vrot.slane %v372, 1
    %v387 = vsel %vm109, %v385, %v386
    %v390 = vpack.c.bf16 %v387, %v384
    %s391 = scalar_lea.vmem [#allocation9], 16
    %v392 = vld [vmem:[%s391] sm:$0xf]
    %v393 = vld [vmem:[%s391 + $0x4] sm:$0xf]
    %v394 = vld [vmem:[%s391 + $0x8] sm:$0xf]
    %v395 = vld [vmem:[%s391 + $0xc] sm:$0xf]
    %v400 = vunpack.c.l.b16 %v392
    %v401 = vunpack.c.l.b16 %v393
    %v402 = vunpack.c.l.b16 %v394
    %v403 = vunpack.c.l.b16 %v395
    %v404 = vpack.c.b16 %v401, %v400
    %v405 = vpack.c.b16 %v403, %v402
    %v409 = vsel %vm83, %v390, 0
    %411 = vmatprep.subr.bf16.mxu0 0
    %412 = vmatpush1.bf16.msra.mxu0 %v404
    %413 = vmatprep.subr.bf16.mxu0 0
    %414 = vmatpush1.bf16.msra.mxu0 %v405
    %415 = vmatprep.subr.bf16.mxu0 0
    %416 = vmatpush1.bf16.msra.mxu0 0
    %417 = vmatprep.subr.bf16.mxu0 0
    %418 = vmatpush1.bf16.msra.mxu0 0
    %419 = vmatprep.subr.bf16.mxu0 0
    %420 = vmatpush1.bf16.msra.mxu0 0
    %421 = vmatprep.subr.bf16.mxu0 0
    %422 = vmatpush1.bf16.msra.mxu0 0
    %423 = vmatprep.subr.bf16.mxu0 0
    %424 = vmatpush1.bf16.msra.mxu0 0
    %425 = vmatprep.subr.bf16.mxu0 0
    %426 = vmatpush1.bf16.msra.mxu0 0
    %427 = vmatprep.subr.bf16.mxu0 0
    %428 = vmatpush1.bf16.msra.mxu0 0
    %429 = vmatprep.subr.bf16.mxu0 0
    %430 = vmatpush1.bf16.msra.mxu0 0
    %431 = vmatprep.subr.bf16.mxu0 0
    %432 = vmatpush1.bf16.msra.mxu0 0
    %433 = vmatprep.subr.bf16.mxu0 0
    %434 = vmatpush1.bf16.msra.mxu0 0
    %435 = vmatprep.subr.bf16.mxu0 0
    %436 = vmatpush1.bf16.msra.mxu0 0
    %437 = vmatprep.subr.bf16.mxu0 0
    %438 = vmatpush1.bf16.msra.mxu0 0
    %439 = vmatprep.subr.bf16.mxu0 0
    %440 = vmatpush1.bf16.msra.mxu0 0
    %441 = vmatprep.subr.bf16.mxu0 0
    %442 = vmatpush1.bf16.msra.mxu0 0
    %443 = vmatprep.mubr.bf16.mxu0 0
    %444 = vmatmul.mubr.bf16.gmra.mrb[0].mxu0 %v409
    %v445 = vpop.f32.mrb[0].mxu0
    %v446 = vadd.f32 0.0, %v445
    %v447 = vpop.f32.mrb[0].mxu0
    %v448 = vpop.f32.mrb[0].mxu0
    %v449 = vadd.f32 0.0, %v448
    %v450 = vpop.f32.mrb[0].mxu0
    %451 = vdwg.mxu0
    %v456 = vunpack.c.l.b16 %v374
    %v457 = vunpack.c.l.b16 %v375
    %v458 = vunpack.c.l.b16 %v376
    %v459 = vunpack.c.l.b16 %v377
    %v460 = vpack.c.b16 %v457, %v456
    %v461 = vpack.c.b16 %v459, %v458
    %v465 = vsel %vm83, %v373, 0
    %467 = vmatprep.subr.bf16.mxu0 0
    %468 = vmatpush1.bf16.msra.mxu0 %v460
    %469 = vmatprep.subr.bf16.mxu0 0
    %470 = vmatpush1.bf16.msra.mxu0 %v461
    %471 = vmatprep.subr.bf16.mxu0 0
    %472 = vmatpush1.bf16.msra.mxu0 0
    %473 = vmatprep.subr.bf16.mxu0 0
    %474 = vmatpush1.bf16.msra.mxu0 0
    %475 = vmatprep.subr.bf16.mxu0 0
    %476 = vmatpush1.bf16.msra.mxu0 0
    %477 = vmatprep.subr.bf16.mxu0 0
    %478 = vmatpush1.bf16.msra.mxu0 0
    %479 = vmatprep.subr.bf16.mxu0 0
    %480 = vmatpush1.bf16.msra.mxu0 0
    %481 = vmatprep.subr.bf16.mxu0 0
    %482 = vmatpush1.bf16.msra.mxu0 0
    %483 = vmatprep.subr.bf16.mxu0 0
    %484 = vmatpush1.bf16.msra.mxu0 0
    %485 = vmatprep.subr.bf16.mxu0 0
    %486 = vmatpush1.bf16.msra.mxu0 0
    %487 = vmatprep.subr.bf16.mxu0 0
    %488 = vmatpush1.bf16.msra.mxu0 0
    %489 = vmatprep.subr.bf16.mxu0 0
    %490 = vmatpush1.bf16.msra.mxu0 0
    %491 = vmatprep.subr.bf16.mxu0 0
    %492 = vmatpush1.bf16.msra.mxu0 0
    %493 = vmatprep.subr.bf16.mxu0 0
    %494 = vmatpush1.bf16.msra.mxu0 0
    %495 = vmatprep.subr.bf16.mxu0 0
    %496 = vmatpush1.bf16.msra.mxu0 0
    %497 = vmatprep.subr.bf16.mxu0 0
    %498 = vmatpush1.bf16.msra.mxu0 0
    %499 = vmatprep.mubr.bf16.mxu0 0
    %500 = vmatmul.mubr.bf16.gmra.mrb[0].mxu0 %v465
    %v501 = vpop.f32.mrb[0].mxu0
    %v502 = vadd.f32 %v446, %v501
    %v503 = vpop.f32.mrb[0].mxu0
    %v504 = vpop.f32.mrb[0].mxu0
    %v505 = vadd.f32 %v449, %v504
    %v506 = vpop.f32.mrb[0].mxu0
    %507 = vdwg.mxu0
    %v508 = vrot.slane %v369, 2
    %v509 = vrot.slane %v370, 2
    %v510 = vsel %vm236, %v508, %v509
    %v511 = vrot.slane %v371, 2
    %v512 = vrot.slane %v372, 2
    %v513 = vsel %vm236, %v511, %v512
    %v516 = vpack.c.bf16 %v513, %v510
    %s517 = scalar_lea.vmem [#allocation9], 32
    %v518 = vld [vmem:[%s517] sm:$0xf]
    %v519 = vld [vmem:[%s517 + $0x4] sm:$0xf]
    %v520 = vld [vmem:[%s517 + $0x8] sm:$0xf]
    %v521 = vld [vmem:[%s517 + $0xc] sm:$0xf]
    %v526 = vunpack.c.l.b16 %v518
    %v527 = vunpack.c.l.b16 %v519
    %v528 = vunpack.c.l.b16 %v520
    %v529 = vunpack.c.l.b16 %v521
    %v530 = vpack.c.b16 %v527, %v526
    %v531 = vpack.c.b16 %v529, %v528
    %v535 = vsel %vm83, %v516, 0
    %537 = vmatprep.subr.bf16.mxu0 0
    %538 = vmatpush1.bf16.msra.mxu0 %v530
    %539 = vmatprep.subr.bf16.mxu0 0
    %540 = vmatpush1.bf16.msra.mxu0 %v531
    %541 = vmatprep.subr.bf16.mxu0 0
    %542 = vmatpush1.bf16.msra.mxu0 0
    %543 = vmatprep.subr.bf16.mxu0 0
    %544 = vmatpush1.bf16.msra.mxu0 0
    %545 = vmatprep.subr.bf16.mxu0 0
    %546 = vmatpush1.bf16.msra.mxu0 0
    %547 = vmatprep.subr.bf16.mxu0 0
    %548 = vmatpush1.bf16.msra.mxu0 0
    %549 = vmatprep.subr.bf16.mxu0 0
    %550 = vmatpush1.bf16.msra.mxu0 0
    %551 = vmatprep.subr.bf16.mxu0 0
    %552 = vmatpush1.bf16.msra.mxu0 0
    %553 = vmatprep.subr.bf16.mxu0 0
    %554 = vmatpush1.bf16.msra.mxu0 0
    %555 = vmatprep.subr.bf16.mxu0 0
    %556 = vmatpush1.bf16.msra.mxu0 0
    %557 = vmatprep.subr.bf16.mxu0 0
    %558 = vmatpush1.bf16.msra.mxu0 0
    %559 = vmatprep.subr.bf16.mxu0 0
    %560 = vmatpush1.bf16.msra.mxu0 0
    %561 = vmatprep.subr.bf16.mxu0 0
    %562 = vmatpush1.bf16.msra.mxu0 0
    %563 = vmatprep.subr.bf16.mxu0 0
    %564 = vmatpush1.bf16.msra.mxu0 0
    %565 = vmatprep.subr.bf16.mxu0 0
    %566 = vmatpush1.bf16.msra.mxu0 0
    %567 = vmatprep.subr.bf16.mxu0 0
    %568 = vmatpush1.bf16.msra.mxu0 0
    %569 = vmatprep.mubr.bf16.mxu0 0
    %570 = vmatmul.mubr.bf16.gmra.mrb[0].mxu0 %v535
    %v571 = vpop.f32.mrb[0].mxu0
    %v572 = vadd.f32 0.0, %v571
    %v573 = vpop.f32.mrb[0].mxu0
    %v574 = vpop.f32.mrb[0].mxu0
    %v575 = vadd.f32 0.0, %v574
    %v576 = vpop.f32.mrb[0].mxu0
    %577 = vdwg.mxu0
    %v578 = vadd.f32 %v502, %v572
    %v579 = vadd.f32 %v505, %v575
    %v581 = vlaneseq
    %v582 = vshrl.u32 %v581, 7
    %v583 = vsub.s32 0, %v582
    %v584 = vrot.slane %v364, %v583
    %v586 = vadd.f32 %v578, %v584
    %v587 = vadd.f32 %v579, %v584
    %v588 = vsel %vm83, %v586, 0.0
    %589 = vadd.xlane.f32.xlu0 %v588
    %v590 = vpop.xlane.xlu0 %589
    %v591 = vsel %vm83, %v587, 0.0
    %592 = vadd.xlane.f32.xlu0 %v591
    %v593 = vpop.xlane.xlu0 %592
    %v594 = vmul.f32 %v590, %v323
    %v595 = vmul.f32 %v593, %v323
    %v596 = vmul.f32 %v586, %v586
    %v597 = vmul.f32 %v587, %v587
    %v598 = vsel %vm83, %v596, 0.0
    %599 = vadd.xlane.f32.xlu0 %v598
    %v600 = vpop.xlane.xlu0 %599
    %v601 = vsel %vm83, %v597, 0.0
    %602 = vadd.xlane.f32.xlu0 %v601
    %v603 = vpop.xlane.xlu0 %602
    %v604 = vmul.f32 %v600, %v323
    %v605 = vmul.f32 %v603, %v323
    %v606 = vmul.f32 %v594, %v594
    %v607 = vmul.f32 %v595, %v595
    %v608 = vsub.f32 %v604, %v606
    %v609 = vsub.f32 %v605, %v607
    %v610 = vsub.f32 %v586, %v594
    %v611 = vsub.f32 %v587, %v595
    %v612 = vadd.f32 %v608, 1e-05
    %v613 = vadd.f32 %v609, 1e-05
    %v614 = vrsqrt.pop %v612
    %v615 = vrsqrt.pop %v613
    %v616 = vmul.f32 %v610, %v614
    %v617 = vmul.f32 %v611, %v615
    %v619 = vlaneseq
    %v620 = vshrl.u32 %v619, 7
    %v621 = vsub.s32 0, %v620
    %v622 = vrot.slane %v365, %v621
    %v624 = vmul.f32 %v616, %v622
    %v625 = vmul.f32 %v617, %v622
    %v627 = vlaneseq
    %v628 = vshrl.u32 %v627, 7
    %v629 = vsub.s32 0, %v628
    %v630 = vrot.slane %v366, %v629
    %v632 = vadd.f32 %v624, %v630
    %v633 = vadd.f32 %v625, %v630
    %v634 = vld [vmem:[%s9] sm:$0x1]
    %v636 = vlaneseq
    %v637 = vshrl.u32 %v636, 7
    %v638 = vsub.s32 0, %v637
    %v639 = vrot.slane %v634, %v638
    %v641 = vmul.f32 %v632, %v639
    %v642 = vmul.f32 %v633, %v639
    %v643 = vsel %vm83, %v641, 0.0
    %644 = vadd.xlane.f32.xlu0 %v643
    %v645 = vpop.xlane.xlu0 %644
    %v646 = vsel %vm83, %v642, 0.0
    %647 = vadd.xlane.f32.xlu0 %v646
    %v648 = vpop.xlane.xlu0 %647
    %v649 = vld [vmem:[#allocation3] sm:$0x1]
    %v651 = vlaneseq
    %v652 = vshrl.u32 %v651, 7
    %v653 = vsub.s32 0, %v652
    %v654 = vrot.slane %v649, %v653
    %655 = vset.pattern.permute.xlu0 0
    %656 = vperm.xlu0 %655, %v654
    %v657 = vpop.permute.xlu0 %656
    %v659 = vadd.f32 %v645, %v657
    %v660 = vadd.f32 %v648, %v657
    %v663 = vlaneseq
    %v664 = vand.u32 %v663, 127
    %v665 = vlaneseq
    %v666 = vshrl.u32 %v665, 7
    %v667 = vsub.s32 %v664, %v666
    %v668 = vrot.slane %v659, %v667
    %v669 = vlaneseq
    %v670 = vshrl.u32 %v669, 7
    %v671 = vsub.s32 %v664, %v670
    %v672 = vrot.slane %v660, %v671
    %vm675 = vcmask 57344
    %676 = vst.msk [vmem:[#allocation10] sm:$0x1] %vm675, %v668
    %677 = vst.msk [vmem:[#allocation10 + $0x1] sm:$0x1] %vm675, %v672
    // Predicated region
    $region58: #{tpu_custom_call.1} parent=1 // pred_check
      _
    $region59: #{tpu_custom_call.1} parent=1 // pred_check_branch
      %679 = sbr.rel (0) target = $region61
    $region60: #{tpu_custom_call.1} parent=1 // pred_region
      %s681 = ssub.s32 32, 32
      %682 = vsyncadd [#allocation6], %s681
      %s683 = sshll.u32 [#allocation10], 4
      %s684 = int_to_ptr.vmem [resolvable:$true] %s683
      %689 = dma.vmem_to_hbm [thread:$0]  %s684, 32, %s11, [#allocation6], 16, 16, 1
    $region61: #{tpu_custom_call.1} parent=1 // pred_fallthru
      _
    // Predicated region
    $region62: #{tpu_custom_call.1} parent=1 // pred_check
      _
    $region63: #{tpu_custom_call.1} parent=1 // pred_check_branch
      %691 = sbr.rel (0) target = $region65
    $region64: #{tpu_custom_call.1} parent=1 // pred_region
      %692 = dma.done [#allocation6], 32
    $region65: #{tpu_custom_call.1} parent=1 // pred_fallthru
      _
    %693 = vsyncpa [#allocation5], 1
    %694 = vsyncpa [#allocation8], 1
    %695 = vsyncpa [#allocation6], 1

</llo_original>
